<compile_context>
chip_gen: v7x
topology: tpu7x:2x2x1
jax: 0.10.0
libtpu: 0.0.40
codegen_flags: <defaults>
</compile_context>

<pallas_src>
import numpy as np
import jax
import jax.numpy as jnp
from jax.experimental import pallas as pl
from jax.experimental.pallas import tpu as pltpu

N_NODES = 64        # 8 graphs x 8 nodes
N_GRAPHS = 8
F_IN = 16           # raw node feature dim
HIDDEN_REP = 32     # hidden_rep_dim (module default is 300; kept small here)
CLS_HIDDEN = 64     # classifier hidden dim
NUM_CLASSES = 10    # module default
N_ANCHORS = 4       # must be >= 2 (unbiased std over anchors)


# ------------------------------ kernel ---------------------------------------

def _fused_kernel(x_ref, ahat_ref, pool_ref, wf_ref, bf_ref, anc_ref,
                  w1t_ref, w1b_ref, b1_ref, w2_ref, b2_ref,
                  mu_cal_ref, std_ref):
    """Single-launch fused forward: features -> per-anchor classifier -> stats."""
    # ---- forward_features: 1-layer GCN + per-graph mean pooling -------------
    z0 = (jnp.dot(x_ref[...], wf_ref[...], preferred_element_type=jnp.float32)
          + bf_ref[...])
    node_h = jnp.maximum(
        jnp.dot(ahat_ref[...], z0, preferred_element_type=jnp.float32), 0.0)
    hidden = jnp.dot(pool_ref[...], node_h,
                     preferred_element_type=jnp.float32)          # [G, D]

    # ---- classifier, all anchors at once -------------------------------------
    # cat(h - a, a) @ W1  ==  h @ W1_top + a @ (W1_bot - W1_top)
    hr_proj = jnp.dot(hidden, w1t_ref[...],
                      preferred_element_type=jnp.float32)          # [G, H]
    anc_proj = jnp.dot(anc_ref[...], w1b_ref[...] - w1t_ref[...],
                       preferred_element_type=jnp.float32)         # [A, H]

    n_anchors = anc_ref.shape[0]
    n_graphs = pool_ref.shape[0]
    cls_hidden = w2_ref.shape[0]
    num_classes = w2_ref.shape[1]

    z1 = hr_proj[None, :, :] + anc_proj[:, None, :] + b1_ref[...]  # [A, G, H]
    h1 = jnp.maximum(z1, 0.0)
    preds = (jnp.dot(h1.reshape(n_anchors * n_graphs, cls_hidden), w2_ref[...],
                     preferred_element_type=jnp.float32)
             + b2_ref[...]).reshape(n_anchors, n_graphs, num_classes)  # [A, G, C]

    # ---- anchor statistics + calibration (preds stay in VMEM) ---------------
    mu = jnp.mean(preds, axis=0)                                   # [G, C]
    sig = jax.nn.sigmoid(preds)
    sig_mean = jnp.mean(sig, axis=0)
    var = jnp.sum((sig - sig_mean) ** 2, axis=0) / (n_anchors - 1)  # unbiased
    std = jnp.sqrt(var)
    c = jnp.mean(std, axis=1, keepdims=True)                        # [G, 1]
    mu_cal_ref[...] = mu * jax.nn.sigmoid(-c)   # == mu / (1 + exp(c))
    std_ref[...] = std


# ------------------------------ wrapper ---------------------------------------

def graph_ant_hidden_reps_forward(x, a_hat, pool, wf, bf, anchors, w1, b1, w2, b2):
    assert anchors.shape[0] >= 2, "unbiased std over anchors needs n_anchors >= 2"
    d = wf.shape[1]
    w1_top = w1[:d, :]          # host-side split: keeps the kernel slice-free
    w1_bot = w1[d:, :]
    g = pool.shape[0]
    c = w2.shape[1]

    vmem = lambda: pl.BlockSpec(memory_space=pltpu.MemorySpace.VMEM)
    mu_cal, std = pl.pallas_call(
        _fused_kernel,
        out_shape=(jax.ShapeDtypeStruct((g, c), jnp.float32),
                   jax.ShapeDtypeStruct((g, c), jnp.float32)),
        in_specs=[vmem() for _ in range(11)],
        out_specs=(vmem(), vmem()),
    )(x, a_hat, pool, wf, bf, anchors, w1_top, w1_bot, b1, w2, b2)
    return mu_cal, std


# ------------------------------ reference -------------------------------------

def _reference(x, a_hat, pool, wf, bf, anchors, w1, b1, w2, b2):
    node_h = jnp.maximum(a_hat @ (x @ wf + bf), 0.0)
    hidden = pool @ node_h                                   # forward_features

    def one(anc):
        anc_rep = jnp.broadcast_to(anc, hidden.shape)        # repeat over graphs
        nf = jnp.concatenate([hidden - anc_rep, anc_rep], axis=1)
        h = jnp.maximum(nf @ w1 + b1, 0.0)
        return h @ w2 + b2                                   # forward_classifier

    preds = jax.vmap(one)(anchors)
    mu = preds.mean(axis=0)
    std = jnp.std(jax.nn.sigmoid(preds), axis=0, ddof=1)
    c = jnp.mean(std, axis=1, keepdims=True)
    return mu / (1.0 + jnp.exp(c)), std


# ------------------------------ setup / main -----------------------------------

def _build_graph():
    """N_GRAPHS ring graphs -> GCN-normalized adjacency + mean-pooling matrix."""
    n_per = N_NODES // N_GRAPHS
    adj = np.zeros((N_NODES, N_NODES), np.float32)
    for g in range(N_GRAPHS):
        base = g * n_per
        for i in range(n_per):
            s, d = base + i, base + (i + 1) % n_per
            adj[s, d] = 1.0
            adj[d, s] = 1.0
    adj += np.eye(N_NODES, dtype=np.float32)                  # self loops
    d_inv_sqrt = 1.0 / np.sqrt(adj.sum(axis=1))
    a_hat = adj * d_inv_sqrt[:, None] * d_inv_sqrt[None, :]   # D^-1/2 A D^-1/2
    pool = np.zeros((N_GRAPHS, N_NODES), np.float32)
    for g in range(N_GRAPHS):
        pool[g, g * n_per:(g + 1) * n_per] = 1.0 / n_per      # mean pooling
    return jnp.asarray(a_hat), jnp.asarray(pool)


if __name__ == "__main__":
    key = jax.random.PRNGKey(0)
    ks = jax.random.split(key, 8)

    x = jax.random.normal(ks[0], (N_NODES, F_IN), jnp.float32)
    a_hat, pool = _build_graph()

    # anchor_type='random': anchors drawn from Normal(mean, std) in hidden-rep space
    anchor_mean = jnp.zeros((HIDDEN_REP,), jnp.float32)
    anchor_std = jnp.ones((HIDDEN_REP,), jnp.float32)
    anchors = anchor_mean + anchor_std * jax.random.normal(
        ks[1], (N_ANCHORS, HIDDEN_REP), jnp.float32)

    # synthetic base-network parameters (classifier first layer takes 2*HIDDEN_REP)
    wf = 0.2 * jax.random.normal(ks[2], (F_IN, HIDDEN_REP), jnp.float32)
    bf = 0.1 * jax.random.normal(ks[3], (1, HIDDEN_REP), jnp.float32)
    w1 = 0.1 * jax.random.normal(ks[4], (2 * HIDDEN_REP, CLS_HIDDEN), jnp.float32)
    b1 = 0.1 * jax.random.normal(ks[5], (1, CLS_HIDDEN), jnp.float32)
    w2 = 0.1 * jax.random.normal(ks[6], (CLS_HIDDEN, NUM_CLASSES), jnp.float32)
    b2 = 0.1 * jax.random.normal(ks[7], (1, NUM_CLASSES), jnp.float32)

    mu_cal, std = graph_ant_hidden_reps_forward(
        x, a_hat, pool, wf, bf, anchors, w1, b1, w2, b2)
    jax.block_until_ready((mu_cal, std))

    mu_ref, std_ref = _reference(x, a_hat, pool, wf, bf, anchors, w1, b1, w2, b2)
    assert jnp.allclose(mu_cal, mu_ref, atol=1e-4, rtol=1e-4)
    assert jnp.allclose(std, std_ref, atol=1e-4, rtol=1e-4)

    print("KERNEL_OK")
</pallas_src>

<mosaic_0001>
module attributes {stable_mosaic.version = 11 : i64} {
  func.func @_fused_kernel(%arg0: memref<64x16xf32, #tpu.memory_space<vmem>>, %arg1: memref<64x64xf32, #tpu.memory_space<vmem>>, %arg2: memref<8x64xf32, #tpu.memory_space<vmem>>, %arg3: memref<16x32xf32, #tpu.memory_space<vmem>>, %arg4: memref<1x32xf32, #tpu.memory_space<vmem>>, %arg5: memref<4x32xf32, #tpu.memory_space<vmem>>, %arg6: memref<32x64xf32, #tpu.memory_space<vmem>>, %arg7: memref<32x64xf32, #tpu.memory_space<vmem>>, %arg8: memref<1x64xf32, #tpu.memory_space<vmem>>, %arg9: memref<64x10xf32, #tpu.memory_space<vmem>>, %arg10: memref<1x10xf32, #tpu.memory_space<vmem>>, %arg11: memref<8x10xf32, #tpu.memory_space<vmem>>, %arg12: memref<8x10xf32, #tpu.memory_space<vmem>>) attributes {dimension_semantics = [], scalar_prefetch = 0 : i64, scratch_operands = 0 : i64, tpu.core_type = #tpu.core_type<tc>} {
    %c0 = arith.constant 0 : index
    %c0_0 = arith.constant 0 : index
    %0 = vector.load %arg0[%c0, %c0_0] : memref<64x16xf32, #tpu.memory_space<vmem>>, vector<64x16xf32>
    %c0_1 = arith.constant 0 : index
    %c0_2 = arith.constant 0 : index
    %1 = vector.load %arg3[%c0_1, %c0_2] : memref<16x32xf32, #tpu.memory_space<vmem>>, vector<16x32xf32>
    %cst = arith.constant dense<0.000000e+00> : vector<64x32xf32>
    %2 = tpu.matmul %0, %1, %cst {dimension_numbers = #tpu.dot_dimension_numbers<[1], [0], [0], [1], [0, 0, 1, 1], [], []>} : vector<64x16xf32>, vector<16x32xf32>, vector<64x32xf32> -> vector<64x32xf32>
    %c0_3 = arith.constant 0 : index
    %c0_4 = arith.constant 0 : index
    %3 = vector.load %arg4[%c0_3, %c0_4] : memref<1x32xf32, #tpu.memory_space<vmem>>, vector<1x32xf32>
    %4 = vector.broadcast %3 : vector<1x32xf32> to vector<64x32xf32>
    %5 = arith.addf %2, %4 : vector<64x32xf32>
    %c0_5 = arith.constant 0 : index
    %c0_6 = arith.constant 0 : index
    %6 = vector.load %arg1[%c0_5, %c0_6] : memref<64x64xf32, #tpu.memory_space<vmem>>, vector<64x64xf32>
    %cst_7 = arith.constant dense<0.000000e+00> : vector<64x32xf32>
    %7 = tpu.matmul %6, %5, %cst_7 {dimension_numbers = #tpu.dot_dimension_numbers<[1], [0], [0], [1], [0, 0, 1, 1], [], []>} : vector<64x64xf32>, vector<64x32xf32>, vector<64x32xf32> -> vector<64x32xf32>
    %cst_8 = arith.constant 0.000000e+00 : f32
    %8 = vector.broadcast %cst_8 : f32 to vector<64x32xf32>
    %9 = arith.maximumf %7, %8 : vector<64x32xf32>
    %c0_9 = arith.constant 0 : index
    %c0_10 = arith.constant 0 : index
    %10 = vector.load %arg2[%c0_9, %c0_10] : memref<8x64xf32, #tpu.memory_space<vmem>>, vector<8x64xf32>
    %cst_11 = arith.constant dense<0.000000e+00> : vector<8x32xf32>
    %11 = tpu.matmul %10, %9, %cst_11 {dimension_numbers = #tpu.dot_dimension_numbers<[1], [0], [0], [1], [0, 0, 1, 1], [], []>} : vector<8x64xf32>, vector<64x32xf32>, vector<8x32xf32> -> vector<8x32xf32>
    %c0_12 = arith.constant 0 : index
    %c0_13 = arith.constant 0 : index
    %12 = vector.load %arg6[%c0_12, %c0_13] : memref<32x64xf32, #tpu.memory_space<vmem>>, vector<32x64xf32>
    %cst_14 = arith.constant dense<0.000000e+00> : vector<8x64xf32>
    %13 = tpu.matmul %11, %12, %cst_14 {dimension_numbers = #tpu.dot_dimension_numbers<[1], [0], [0], [1], [0, 0, 1, 1], [], []>} : vector<8x32xf32>, vector<32x64xf32>, vector<8x64xf32> -> vector<8x64xf32>
    %c0_15 = arith.constant 0 : index
    %c0_16 = arith.constant 0 : index
    %14 = vector.load %arg5[%c0_15, %c0_16] : memref<4x32xf32, #tpu.memory_space<vmem>>, vector<4x32xf32>
    %c0_17 = arith.constant 0 : index
    %c0_18 = arith.constant 0 : index
    %15 = vector.load %arg7[%c0_17, %c0_18] : memref<32x64xf32, #tpu.memory_space<vmem>>, vector<32x64xf32>
    %c0_19 = arith.constant 0 : index
    %c0_20 = arith.constant 0 : index
    %16 = vector.load %arg6[%c0_19, %c0_20] : memref<32x64xf32, #tpu.memory_space<vmem>>, vector<32x64xf32>
    %17 = arith.subf %15, %16 : vector<32x64xf32>
    %cst_21 = arith.constant dense<0.000000e+00> : vector<4x64xf32>
    %18 = tpu.matmul %14, %17, %cst_21 {dimension_numbers = #tpu.dot_dimension_numbers<[1], [0], [0], [1], [0, 0, 1, 1], [], []>} : vector<4x32xf32>, vector<32x64xf32>, vector<4x64xf32> -> vector<4x64xf32>
    %19 = vector.shape_cast %13 : vector<8x64xf32> to vector<1x8x64xf32>
    %20 = vector.shape_cast %18 : vector<4x64xf32> to vector<4x1x64xf32>
    %21 = vector.broadcast %19 : vector<1x8x64xf32> to vector<4x8x64xf32>
    %22 = vector.broadcast %20 : vector<4x1x64xf32> to vector<4x8x64xf32>
    %23 = arith.addf %21, %22 : vector<4x8x64xf32>
    %c0_22 = arith.constant 0 : index
    %c0_23 = arith.constant 0 : index
    %24 = vector.load %arg8[%c0_22, %c0_23] : memref<1x64xf32, #tpu.memory_space<vmem>>, vector<1x64xf32>
    %25 = vector.shape_cast %24 : vector<1x64xf32> to vector<1x1x64xf32>
    %26 = vector.broadcast %25 : vector<1x1x64xf32> to vector<4x8x64xf32>
    %27 = arith.addf %23, %26 : vector<4x8x64xf32>
    %cst_24 = arith.constant 0.000000e+00 : f32
    %28 = vector.broadcast %cst_24 : f32 to vector<4x8x64xf32>
    %29 = arith.maximumf %27, %28 : vector<4x8x64xf32>
    %30 = vector.shape_cast %29 : vector<4x8x64xf32> to vector<32x64xf32>
    %c0_25 = arith.constant 0 : index
    %c0_26 = arith.constant 0 : index
    %31 = vector.load %arg9[%c0_25, %c0_26] : memref<64x10xf32, #tpu.memory_space<vmem>>, vector<64x10xf32>
    %cst_27 = arith.constant dense<0.000000e+00> : vector<32x10xf32>
    %32 = tpu.matmul %30, %31, %cst_27 {dimension_numbers = #tpu.dot_dimension_numbers<[1], [0], [0], [1], [0, 0, 1, 1], [], []>} : vector<32x64xf32>, vector<64x10xf32>, vector<32x10xf32> -> vector<32x10xf32>
    %c0_28 = arith.constant 0 : index
    %c0_29 = arith.constant 0 : index
    %33 = vector.load %arg10[%c0_28, %c0_29] : memref<1x10xf32, #tpu.memory_space<vmem>>, vector<1x10xf32>
    %34 = vector.broadcast %33 : vector<1x10xf32> to vector<32x10xf32>
    %35 = arith.addf %32, %34 : vector<32x10xf32>
    %36 = vector.shape_cast %35 : vector<32x10xf32> to vector<4x8x10xf32>
    %cst_30 = arith.constant dense<0.000000e+00> : vector<8x10xf32>
    %37 = vector.multi_reduction <add>, %36, %cst_30 [0] : vector<4x8x10xf32> to vector<8x10xf32>
    %cst_31 = arith.constant 4.000000e+00 : f32
    %38 = vector.broadcast %cst_31 : f32 to vector<8x10xf32>
    %39 = arith.divf %37, %38 : vector<8x10xf32>
    %40 = arith.negf %36 : vector<4x8x10xf32>
    %41 = math.exp %40 : vector<4x8x10xf32>
    %cst_32 = arith.constant 1.000000e+00 : f32
    %42 = vector.broadcast %cst_32 : f32 to vector<4x8x10xf32>
    %43 = arith.addf %42, %41 : vector<4x8x10xf32>
    %44 = arith.divf %42, %43 : vector<4x8x10xf32>
    %cst_33 = arith.constant dense<0.000000e+00> : vector<8x10xf32>
    %45 = vector.multi_reduction <add>, %44, %cst_33 [0] : vector<4x8x10xf32> to vector<8x10xf32>
    %cst_34 = arith.constant 4.000000e+00 : f32
    %46 = vector.broadcast %cst_34 : f32 to vector<8x10xf32>
    %47 = arith.divf %45, %46 : vector<8x10xf32>
    %48 = vector.shape_cast %47 : vector<8x10xf32> to vector<1x8x10xf32>
    %49 = vector.broadcast %48 : vector<1x8x10xf32> to vector<4x8x10xf32>
    %50 = arith.subf %44, %49 : vector<4x8x10xf32>
    %51 = arith.mulf %50, %50 : vector<4x8x10xf32>
    %cst_35 = arith.constant dense<0.000000e+00> : vector<8x10xf32>
    %52 = vector.multi_reduction <add>, %51, %cst_35 [0] : vector<4x8x10xf32> to vector<8x10xf32>
    %cst_36 = arith.constant 3.000000e+00 : f32
    %53 = vector.broadcast %cst_36 : f32 to vector<8x10xf32>
    %54 = arith.divf %52, %53 : vector<8x10xf32>
    %55 = math.sqrt %54 : vector<8x10xf32>
    %cst_37 = arith.constant dense<0.000000e+00> : vector<8xf32>
    %56 = vector.multi_reduction <add>, %55, %cst_37 [1] : vector<8x10xf32> to vector<8xf32>
    %57 = vector.shape_cast %56 : vector<8xf32> to vector<8x1xf32>
    %cst_38 = arith.constant 1.000000e+01 : f32
    %58 = vector.broadcast %cst_38 : f32 to vector<8x1xf32>
    %59 = arith.divf %57, %58 : vector<8x1xf32>
    %cst_39 = arith.constant 0.000000e+00 : f32
    %60 = vector.broadcast %cst_39 : f32 to vector<8x1xf32>
    %61 = arith.subf %60, %59 : vector<8x1xf32>
    %62 = arith.negf %61 : vector<8x1xf32>
    %63 = math.exp %62 : vector<8x1xf32>
    %cst_40 = arith.constant 1.000000e+00 : f32
    %64 = vector.broadcast %cst_40 : f32 to vector<8x1xf32>
    %65 = arith.addf %64, %63 : vector<8x1xf32>
    %66 = arith.divf %64, %65 : vector<8x1xf32>
    %67 = vector.broadcast %66 : vector<8x1xf32> to vector<8x10xf32>
    %68 = arith.mulf %39, %67 : vector<8x10xf32>
    %c0_41 = arith.constant 0 : index
    %c0_42 = arith.constant 0 : index
    %69 = vector.load %arg11[%c0_41, %c0_42] : memref<8x10xf32, #tpu.memory_space<vmem>>, vector<8x10xf32>
    tpu.vector_store %arg11[%c0_41, %c0_42], %68 {strides = array<i32>} : memref<8x10xf32, #tpu.memory_space<vmem>>, vector<8x10xf32>,
    %c0_43 = arith.constant 0 : index
    %c0_44 = arith.constant 0 : index
    %70 = vector.load %arg12[%c0_43, %c0_44] : memref<8x10xf32, #tpu.memory_space<vmem>>, vector<8x10xf32>
    tpu.vector_store %arg12[%c0_43, %c0_44], %55 {strides = array<i32>} : memref<8x10xf32, #tpu.memory_space<vmem>>, vector<8x10xf32>,
    return
  }
}

</mosaic_0001>

<llo_original>
// kernel: tpu_custom_call.1
$region0: #{tpu_custom_call.1}
  #allocation0 [shape = 'u32[]', space=smem, size = 0x4, offset = 0x4, fixed_abs, tag = 'smem constant byte address 0x4 - core index']
  #allocation1 [shape = 'u32[144,128]{1,0:T(1,128)}', space=vmem, size = 0x12000, scoped, tag = 'internal scratch']
  %s0 = inlined_call_operand.vmem [shape: f32[64,16], index: 0, kind: input, shape index: {}]
  %s1 = inlined_call_operand.vmem [shape: f32[64,64], index: 1, kind: input, shape index: {}]
  %s2 = inlined_call_operand.hbm [shape: f32[8,64], index: 2, kind: input, shape index: {}]
  %s3 = inlined_call_operand.vmem [shape: f32[16,32], index: 3, kind: input, shape index: {}]
  %s4 = inlined_call_operand.vmem [shape: f32[1,32], index: 4, kind: input, shape index: {}]
  %s5 = inlined_call_operand.vmem [shape: f32[4,32], index: 5, kind: input, shape index: {}]
  %s6 = inlined_call_operand.vmem [shape: f32[32,64], index: 6, kind: input, shape index: {}]
  %s7 = inlined_call_operand.vmem [shape: f32[32,64], index: 7, kind: input, shape index: {}]
  %s8 = inlined_call_operand.vmem [shape: f32[1,64], index: 8, kind: input, shape index: {}]
  %s9 = inlined_call_operand.vmem [shape: f32[64,10], index: 9, kind: input, shape index: {}]
  %s10 = inlined_call_operand.vmem [shape: f32[1,10], index: 10, kind: input, shape index: {}]
  %s11 = inlined_call_operand.hbm [shape: f32[8,10], index: 11, kind: output, shape index: {0}]
  %s12 = inlined_call_operand.hbm [shape: f32[8,10], index: 12, kind: output, shape index: {1}]
  %13 = xla_tuple %s11, %s12
  %s14 = sld [smem:[#allocation0]]
  $region66: #{tpu_custom_call.1} parent=0
    _
  %s16 = ssub.s32 1, %s14
  %s17 = scalar_select 0, %s16, %s14
  $region1: #{tpu_custom_call.1} parent=0
    #allocation2 [shape = 'u8[4096]{0}', space=vmem, size = 0x1000, scoped, tag = 'input window, operand 2, single buffered']
    #allocation3 [shape = 's32[1]{0}', space=sflag, size = 0x4, scoped, tag = 'scoped memory for tpu_custom_call.1']
    #allocation4 [shape = 's32[1]{0}', space=sflag, size = 0x4, scoped, tag = 'scoped memory for tpu_custom_call.1']
    #allocation5 [shape = 'u8[4096]{0}', space=vmem, size = 0x1000, scoped, tag = 'output window, operand 0, single buffered']
    #allocation6 [shape = 'u8[4096]{0}', space=vmem, size = 0x1000, scoped, tag = 'output window, operand 1, single buffered']
    #allocation7 [shape = 's32[1]{0}', space=sflag, size = 0x4, scoped, tag = 'scoped memory for tpu_custom_call.1']
    %18 = vsyncpa [#allocation3], 0
    %19 = vsyncpa [#allocation4], 0
    %20 = vsyncpa [#allocation7], 0
    // Predicated region
    $region2: #{tpu_custom_call.1} parent=1 // pred_check
      _
    $region3: #{tpu_custom_call.1} parent=1 // pred_check_branch
      %22 = sbr.rel (0) target = $region5
    $region4: #{tpu_custom_call.1} parent=1 // pred_region
      _
    $region5: #{tpu_custom_call.1} parent=1 // pred_fallthru
      _
    // Predicated region
    $region6: #{tpu_custom_call.1} parent=1 // pred_check
      _
    $region7: #{tpu_custom_call.1} parent=1 // pred_check_branch
      %24 = sbr.rel (0) target = $region9
    $region8: #{tpu_custom_call.1} parent=1 // pred_region
      _
    $region9: #{tpu_custom_call.1} parent=1 // pred_fallthru
      _
    // Predicated region
    $region10: #{tpu_custom_call.1} parent=1 // pred_check
      _
    $region11: #{tpu_custom_call.1} parent=1 // pred_check_branch
      %26 = sbr.rel (0) target = $region13
    $region12: #{tpu_custom_call.1} parent=1 // pred_region
      %s28 = ssub.s32 128, 128
      %29 = vsyncadd [#allocation3], %s28
      %s31 = sshll.u32 [#allocation2], 4
      %s32 = int_to_ptr.vmem [resolvable:$true] %s31
      %34 = dma.hbm_to_vmem [thread:$0]  %s2, 128, %s32, [#allocation3]
    $region13: #{tpu_custom_call.1} parent=1 // pred_fallthru
      _
    // Predicated region
    $region14: #{tpu_custom_call.1} parent=1 // pred_check
      _
    $region15: #{tpu_custom_call.1} parent=1 // pred_check_branch
      %36 = sbr.rel (0) target = $region17
    $region16: #{tpu_custom_call.1} parent=1 // pred_region
      _
    $region17: #{tpu_custom_call.1} parent=1 // pred_fallthru
      _
    // Predicated region
    $region18: #{tpu_custom_call.1} parent=1 // pred_check
      _
    $region19: #{tpu_custom_call.1} parent=1 // pred_check_branch
      %38 = sbr.rel (0) target = $region21
    $region20: #{tpu_custom_call.1} parent=1 // pred_region
      _
    $region21: #{tpu_custom_call.1} parent=1 // pred_fallthru
      _
    // Predicated region
    $region22: #{tpu_custom_call.1} parent=1 // pred_check
      _
    $region23: #{tpu_custom_call.1} parent=1 // pred_check_branch
      %40 = sbr.rel (0) target = $region25
    $region24: #{tpu_custom_call.1} parent=1 // pred_region
      _
    $region25: #{tpu_custom_call.1} parent=1 // pred_fallthru
      _
    // Predicated region
    $region26: #{tpu_custom_call.1} parent=1 // pred_check
      _
    $region27: #{tpu_custom_call.1} parent=1 // pred_check_branch
      %42 = sbr.rel (0) target = $region29
    $region28: #{tpu_custom_call.1} parent=1 // pred_region
      _
    $region29: #{tpu_custom_call.1} parent=1 // pred_fallthru
      _
    // Predicated region
    $region30: #{tpu_custom_call.1} parent=1 // pred_check
      _
    $region31: #{tpu_custom_call.1} parent=1 // pred_check_branch
      %44 = sbr.rel (0) target = $region33
    $region32: #{tpu_custom_call.1} parent=1 // pred_region
      _
    $region33: #{tpu_custom_call.1} parent=1 // pred_fallthru
      _
    // Predicated region
    $region34: #{tpu_custom_call.1} parent=1 // pred_check
      _
    $region35: #{tpu_custom_call.1} parent=1 // pred_check_branch
      %46 = sbr.rel (0) target = $region37
    $region36: #{tpu_custom_call.1} parent=1 // pred_region
      _
    $region37: #{tpu_custom_call.1} parent=1 // pred_fallthru
      _
    // Predicated region
    $region38: #{tpu_custom_call.1} parent=1 // pred_check
      _
    $region39: #{tpu_custom_call.1} parent=1 // pred_check_branch
      %48 = sbr.rel (0) target = $region41
    $region40: #{tpu_custom_call.1} parent=1 // pred_region
      _
    $region41: #{tpu_custom_call.1} parent=1 // pred_fallthru
      _
    // Predicated region
    $region42: #{tpu_custom_call.1} parent=1 // pred_check
      _
    $region43: #{tpu_custom_call.1} parent=1 // pred_check_branch
      %50 = sbr.rel (0) target = $region45
    $region44: #{tpu_custom_call.1} parent=1 // pred_region
      _
    $region45: #{tpu_custom_call.1} parent=1 // pred_fallthru
      _
    // Predicated region
    $region46: #{tpu_custom_call.1} parent=1 // pred_check
      _
    $region47: #{tpu_custom_call.1} parent=1 // pred_check_branch
      %52 = sbr.rel (0) target = $region49
    $region48: #{tpu_custom_call.1} parent=1 // pred_region
      %53 = dma.done [#allocation3], 128
    $region49: #{tpu_custom_call.1} parent=1 // pred_fallthru
      _
    %v54 = vld [vmem:[%s0] sm:$0xff]
    %v55 = vld [vmem:[%s0 + $0x8] sm:$0xff]
    %v56 = vld [vmem:[%s0 + $0x10] sm:$0xff]
    %v57 = vld [vmem:[%s0 + $0x18] sm:$0xff]
    %v58 = vld [vmem:[%s0 + $0x20] sm:$0xff]
    %v59 = vld [vmem:[%s0 + $0x28] sm:$0xff]
    %v60 = vld [vmem:[%s0 + $0x30] sm:$0xff]
    %v61 = vld [vmem:[%s0 + $0x38] sm:$0xff]
    %v62 = vld [vmem:[%s3] sm:$0xff]
    %v63 = vld [vmem:[%s3 + $0x8] sm:$0xff]
    %v64 = vld [vmem:[%s4] sm:$0x1]
    %v66 = vlaneseq
    %v67 = vshrl.u32 %v66, 7
    %v68 = vsub.s32 0, %v67
    %v69 = vrot.slane %v64, %v68
    %vm71 = vcmask 130048
    %v73 = vsel %vm71, %v54, 0
    %v76 = vsel %vm71, %v55, 0
    %v79 = vsel %vm71, %v56, 0
    %v82 = vsel %vm71, %v57, 0
    %v85 = vsel %vm71, %v58, 0
    %v88 = vsel %vm71, %v59, 0
    %v91 = vsel %vm71, %v60, 0
    %v94 = vsel %vm71, %v61, 0
    %96 = vmatprep.subr.mxu0 0.0
    %97 = vmatpush1.msra.mxu0 %v62
    %98 = vmatprep.subr.mxu0 0.0
    %99 = vmatpush1.msra.mxu0 %v63
    %100 = vmatprep.subr.mxu0 0.0
    %101 = vmatpush1.msra.mxu0 0.0
    %102 = vmatprep.subr.mxu0 0.0
    %103 = vmatpush1.msra.mxu0 0.0
    %104 = vmatprep.subr.mxu0 0.0
    %105 = vmatpush1.msra.mxu0 0.0
    %106 = vmatprep.subr.mxu0 0.0
    %107 = vmatpush1.msra.mxu0 0.0
    %108 = vmatprep.subr.mxu0 0.0
    %109 = vmatpush1.msra.mxu0 0.0
    %110 = vmatprep.subr.mxu0 0.0
    %111 = vmatpush1.msra.mxu0 0.0
    %112 = vmatprep.subr.mxu0 0.0
    %113 = vmatpush1.msra.mxu0 0.0
    %114 = vmatprep.subr.mxu0 0.0
    %115 = vmatpush1.msra.mxu0 0.0
    %116 = vmatprep.subr.mxu0 0.0
    %117 = vmatpush1.msra.mxu0 0.0
    %118 = vmatprep.subr.mxu0 0.0
    %119 = vmatpush1.msra.mxu0 0.0
    %120 = vmatprep.subr.mxu0 0.0
    %121 = vmatpush1.msra.mxu0 0.0
    %122 = vmatprep.subr.mxu0 0.0
    %123 = vmatpush1.msra.mxu0 0.0
    %124 = vmatprep.subr.mxu0 0.0
    %125 = vmatpush1.msra.mxu0 0.0
    %126 = vmatprep.subr.mxu0 0.0
    %127 = vmatpush1.msra.mxu0 0.0
    %128 = vmatprep.subr.mxu0 0.0
    %129 = vmatpush1.msra.mxu0 0.0
    %130 = vmatprep.subr.mxu0 0.0
    %131 = vmatpush1.msra.mxu0 0.0
    %132 = vmatprep.subr.mxu0 0.0
    %133 = vmatpush1.msra.mxu0 0.0
    %134 = vmatprep.subr.mxu0 0.0
    %135 = vmatpush1.msra.mxu0 0.0
    %136 = vmatprep.subr.mxu0 0.0
    %137 = vmatpush1.msra.mxu0 0.0
    %138 = vmatprep.subr.mxu0 0.0
    %139 = vmatpush1.msra.mxu0 0.0
    %140 = vmatprep.subr.mxu0 0.0
    %141 = vmatpush1.msra.mxu0 0.0
    %142 = vmatprep.subr.mxu0 0.0
    %143 = vmatpush1.msra.mxu0 0.0
    %144 = vmatprep.subr.mxu0 0.0
    %145 = vmatpush1.msra.mxu0 0.0
    %146 = vmatprep.subr.mxu0 0.0
    %147 = vmatpush1.msra.mxu0 0.0
    %148 = vmatprep.subr.mxu0 0.0
    %149 = vmatpush1.msra.mxu0 0.0
    %150 = vmatprep.subr.mxu0 0.0
    %151 = vmatpush1.msra.mxu0 0.0
    %152 = vmatprep.subr.mxu0 0.0
    %153 = vmatpush1.msra.mxu0 0.0
    %154 = vmatprep.subr.mxu0 0.0
    %155 = vmatpush1.msra.mxu0 0.0
    %156 = vmatprep.subr.mxu0 0.0
    %157 = vmatpush1.msra.mxu0 0.0
    %158 = vmatprep.subr.mxu0 0.0
    %159 = vmatpush1.msra.mxu0 0.0
    %160 = vmatprep.mubr.f32.mxu0 0.0
    %161 = vmatmul.mubr.f32.gmra.mrb[0].mxu0 %v73
    %v162 = vpop.f32.mrb[0].mxu0
    %v163 = vadd.f32 %v69, %v162
    %v164 = vpop.f32.mrb[0].mxu0
    %165 = vmatprep.mubr.f32.mxu0 0.0
    %166 = vmatmul.mubr.f32.gmra.mrb[0].mxu0 %v76
    %v167 = vpop.f32.mrb[0].mxu0
    %v168 = vadd.f32 %v69, %v167
    %v169 = vpop.f32.mrb[0].mxu0
    %170 = vmatprep.mubr.f32.mxu0 0.0
    %171 = vmatmul.mubr.f32.gmra.mrb[0].mxu0 %v79
    %v172 = vpop.f32.mrb[0].mxu0
    %v173 = vadd.f32 %v69, %v172
    %v174 = vpop.f32.mrb[0].mxu0
    %175 = vmatprep.mubr.f32.mxu0 0.0
    %176 = vmatmul.mubr.f32.gmra.mrb[0].mxu0 %v82
    %v177 = vpop.f32.mrb[0].mxu0
    %v178 = vadd.f32 %v69, %v177
    %v179 = vpop.f32.mrb[0].mxu0
    %180 = vmatprep.mubr.f32.mxu0 0.0
    %181 = vmatmul.mubr.f32.gmra.mrb[0].mxu0 %v85
    %v182 = vpop.f32.mrb[0].mxu0
    %v183 = vadd.f32 %v69, %v182
    %v184 = vpop.f32.mrb[0].mxu0
    %185 = vmatprep.mubr.f32.mxu0 0.0
    %186 = vmatmul.mubr.f32.gmra.mrb[0].mxu0 %v88
    %v187 = vpop.f32.mrb[0].mxu0
    %v188 = vadd.f32 %v69, %v187
    %v189 = vpop.f32.mrb[0].mxu0
    %190 = vmatprep.mubr.f32.mxu0 0.0
    %191 = vmatmul.mubr.f32.gmra.mrb[0].mxu0 %v91
    %v192 = vpop.f32.mrb[0].mxu0
    %v193 = vadd.f32 %v69, %v192
    %v194 = vpop.f32.mrb[0].mxu0
    %195 = vmatprep.mubr.f32.mxu0 0.0
    %196 = vmatmul.mubr.f32.gmra.mrb[0].mxu0 %v94
    %v197 = vpop.f32.mrb[0].mxu0
    %v198 = vadd.f32 %v69, %v197
    %v199 = vpop.f32.mrb[0].mxu0
    %200 = vdwg.mxu0
    %v201 = vld [vmem:[%s1] sm:$0xff]
    %v202 = vld [vmem:[%s1 + $0x8] sm:$0xff]
    %v203 = vld [vmem:[%s1 + $0x10] sm:$0xff]
    %v204 = vld [vmem:[%s1 + $0x18] sm:$0xff]
    %v205 = vld [vmem:[%s1 + $0x20] sm:$0xff]
    %v206 = vld [vmem:[%s1 + $0x28] sm:$0xff]
    %v207 = vld [vmem:[%s1 + $0x30] sm:$0xff]
    %v208 = vld [vmem:[%s1 + $0x38] sm:$0xff]
    %vm209 = vcmask 523264
    %v211 = vsel %vm209, %v201, 0
    %v214 = vsel %vm209, %v202, 0
    %v217 = vsel %vm209, %v203, 0
    %v220 = vsel %vm209, %v204, 0
    %v223 = vsel %vm209, %v205, 0
    %v226 = vsel %vm209, %v206, 0
    %v229 = vsel %vm209, %v207, 0
    %v232 = vsel %vm209, %v208, 0
    %234 = vmatprep.subr.mxu0 0.0
    %235 = vmatpush1.msra.mxu0 %v163
    %236 = vmatprep.subr.mxu0 0.0
    %237 = vmatpush1.msra.mxu0 %v168
    %238 = vmatprep.subr.mxu0 0.0
    %239 = vmatpush1.msra.mxu0 %v173
    %240 = vmatprep.subr.mxu0 0.0
    %241 = vmatpush1.msra.mxu0 %v178
    %242 = vmatprep.subr.mxu0 0.0
    %243 = vmatpush1.msra.mxu0 %v183
    %244 = vmatprep.subr.mxu0 0.0
    %245 = vmatpush1.msra.mxu0 %v188
    %246 = vmatprep.subr.mxu0 0.0
    %247 = vmatpush1.msra.mxu0 %v193
    %248 = vmatprep.subr.mxu0 0.0
    %249 = vmatpush1.msra.mxu0 %v198
    %250 = vmatprep.subr.mxu0 0.0
    %251 = vmatpush1.msra.mxu0 0.0
    %252 = vmatprep.subr.mxu0 0.0
    %253 = vmatpush1.msra.mxu0 0.0
    %254 = vmatprep.subr.mxu0 0.0
    %255 = vmatpush1.msra.mxu0 0.0
    %256 = vmatprep.subr.mxu0 0.0
    %257 = vmatpush1.msra.mxu0 0.0
    %258 = vmatprep.subr.mxu0 0.0
    %259 = vmatpush1.msra.mxu0 0.0
    %260 = vmatprep.subr.mxu0 0.0
    %261 = vmatpush1.msra.mxu0 0.0
    %262 = vmatprep.subr.mxu0 0.0
    %263 = vmatpush1.msra.mxu0 0.0
    %264 = vmatprep.subr.mxu0 0.0
    %265 = vmatpush1.msra.mxu0 0.0
    %266 = vmatprep.subr.mxu0 0.0
    %267 = vmatpush1.msra.mxu0 0.0
    %268 = vmatprep.subr.mxu0 0.0
    %269 = vmatpush1.msra.mxu0 0.0
    %270 = vmatprep.subr.mxu0 0.0
    %271 = vmatpush1.msra.mxu0 0.0
    %272 = vmatprep.subr.mxu0 0.0
    %273 = vmatpush1.msra.mxu0 0.0
    %274 = vmatprep.subr.mxu0 0.0
    %275 = vmatpush1.msra.mxu0 0.0
    %276 = vmatprep.subr.mxu0 0.0
    %277 = vmatpush1.msra.mxu0 0.0
    %278 = vmatprep.subr.mxu0 0.0
    %279 = vmatpush1.msra.mxu0 0.0
    %280 = vmatprep.subr.mxu0 0.0
    %281 = vmatpush1.msra.mxu0 0.0
    %282 = vmatprep.subr.mxu0 0.0
    %283 = vmatpush1.msra.mxu0 0.0
    %284 = vmatprep.subr.mxu0 0.0
    %285 = vmatpush1.msra.mxu0 0.0
    %286 = vmatprep.subr.mxu0 0.0
    %287 = vmatpush1.msra.mxu0 0.0
    %288 = vmatprep.subr.mxu0 0.0
    %289 = vmatpush1.msra.mxu0 0.0
    %290 = vmatprep.subr.mxu0 0.0
    %291 = vmatpush1.msra.mxu0 0.0
    %292 = vmatprep.subr.mxu0 0.0
    %293 = vmatpush1.msra.mxu0 0.0
    %294 = vmatprep.subr.mxu0 0.0
    %295 = vmatpush1.msra.mxu0 0.0
    %296 = vmatprep.subr.mxu0 0.0
    %297 = vmatpush1.msra.mxu0 0.0
    %298 = vmatprep.mubr.f32.mxu0 0.0
    %299 = vmatmul.mubr.f32.gmra.mrb[0].mxu0 %v211
    %v300 = vpop.f32.mrb[0].mxu0
    %v301 = vadd.f32 0.0, %v300
    %v302 = vpop.f32.mrb[0].mxu0
    %303 = vmatprep.mubr.f32.mxu0 0.0
    %304 = vmatmul.mubr.f32.gmra.mrb[0].mxu0 %v214
    %v305 = vpop.f32.mrb[0].mxu0
    %v306 = vadd.f32 0.0, %v305
    %v307 = vpop.f32.mrb[0].mxu0
    %308 = vmatprep.mubr.f32.mxu0 0.0
    %309 = vmatmul.mubr.f32.gmra.mrb[0].mxu0 %v217
    %v310 = vpop.f32.mrb[0].mxu0
    %v311 = vadd.f32 0.0, %v310
    %v312 = vpop.f32.mrb[0].mxu0
    %313 = vmatprep.mubr.f32.mxu0 0.0
    %314 = vmatmul.mubr.f32.gmra.mrb[0].mxu0 %v220
    %v315 = vpop.f32.mrb[0].mxu0
    %v316 = vadd.f32 0.0, %v315
    %v317 = vpop.f32.mrb[0].mxu0
    %318 = vmatprep.mubr.f32.mxu0 0.0
    %319 = vmatmul.mubr.f32.gmra.mrb[0].mxu0 %v223
    %v320 = vpop.f32.mrb[0].mxu0
    %v321 = vadd.f32 0.0, %v320
    %v322 = vpop.f32.mrb[0].mxu0
    %323 = vmatprep.mubr.f32.mxu0 0.0
    %324 = vmatmul.mubr.f32.gmra.mrb[0].mxu0 %v226
    %v325 = vpop.f32.mrb[0].mxu0
    %v326 = vadd.f32 0.0, %v325
    %v327 = vpop.f32.mrb[0].mxu0
    %328 = vmatprep.mubr.f32.mxu0 0.0
    %329 = vmatmul.mubr.f32.gmra.mrb[0].mxu0 %v229
    %v330 = vpop.f32.mrb[0].mxu0
    %v331 = vadd.f32 0.0, %v330
    %v332 = vpop.f32.mrb[0].mxu0
    %333 = vmatprep.mubr.f32.mxu0 0.0
    %334 = vmatmul.mubr.f32.gmra.mrb[0].mxu0 %v232
    %v335 = vpop.f32.mrb[0].mxu0
    %v336 = vadd.f32 0.0, %v335
    %v337 = vpop.f32.mrb[0].mxu0
    %338 = vdwg.mxu0
    %v339 = vmax.f32 %v301, 0.0
    %v340 = vmax.f32 %v306, 0.0
    %v341 = vmax.f32 %v311, 0.0
    %v342 = vmax.f32 %v316, 0.0
    %v343 = vmax.f32 %v321, 0.0
    %v344 = vmax.f32 %v326, 0.0
    %v345 = vmax.f32 %v331, 0.0
    %v346 = vmax.f32 %v336, 0.0
    %v347 = vld [vmem:[#allocation2] sm:$0xff]
    %v349 = vsel %vm209, %v347, 0
    %351 = vmatprep.subr.mxu0 0.0
    %352 = vmatpush1.msra.mxu0 %v339
    %353 = vmatprep.subr.mxu0 0.0
    %354 = vmatpush1.msra.mxu0 %v340
    %355 = vmatprep.subr.mxu0 0.0
    %356 = vmatpush1.msra.mxu0 %v341
    %357 = vmatprep.subr.mxu0 0.0
    %358 = vmatpush1.msra.mxu0 %v342
    %359 = vmatprep.subr.mxu0 0.0
    %360 = vmatpush1.msra.mxu0 %v343
    %361 = vmatprep.subr.mxu0 0.0
    %362 = vmatpush1.msra.mxu0 %v344
    %363 = vmatprep.subr.mxu0 0.0
    %364 = vmatpush1.msra.mxu0 %v345
    %365 = vmatprep.subr.mxu0 0.0
    %366 = vmatpush1.msra.mxu0 %v346
    %367 = vmatprep.subr.mxu0 0.0
    %368 = vmatpush1.msra.mxu0 0.0
    %369 = vmatprep.subr.mxu0 0.0
    %370 = vmatpush1.msra.mxu0 0.0
    %371 = vmatprep.subr.mxu0 0.0
    %372 = vmatpush1.msra.mxu0 0.0
    %373 = vmatprep.subr.mxu0 0.0
    %374 = vmatpush1.msra.mxu0 0.0
    %375 = vmatprep.subr.mxu0 0.0
    %376 = vmatpush1.msra.mxu0 0.0
    %377 = vmatprep.subr.mxu0 0.0
    %378 = vmatpush1.msra.mxu0 0.0
    %379 = vmatprep.subr.mxu0 0.0
    %380 = vmatpush1.msra.mxu0 0.0
    %381 = vmatprep.subr.mxu0 0.0
    %382 = vmatpush1.msra.mxu0 0.0
    %383 = vmatprep.subr.mxu0 0.0
    %384 = vmatpush1.msra.mxu0 0.0
    %385 = vmatprep.subr.mxu0 0.0
    %386 = vmatpush1.msra.mxu0 0.0
    %387 = vmatprep.subr.mxu0 0.0
    %388 = vmatpush1.msra.mxu0 0.0
    %389 = vmatprep.subr.mxu0 0.0
    %390 = vmatpush1.msra.mxu0 0.0
    %391 = vmatprep.subr.mxu0 0.0
    %392 = vmatpush1.msra.mxu0 0.0
    %393 = vmatprep.subr.mxu0 0.0
    %394 = vmatpush1.msra.mxu0 0.0
    %395 = vmatprep.subr.mxu0 0.0
    %396 = vmatpush1.msra.mxu0 0.0
    %397 = vmatprep.subr.mxu0 0.0
    %398 = vmatpush1.msra.mxu0 0.0
    %399 = vmatprep.subr.mxu0 0.0
    %400 = vmatpush1.msra.mxu0 0.0
    %401 = vmatprep.subr.mxu0 0.0
    %402 = vmatpush1.msra.mxu0 0.0
    %403 = vmatprep.subr.mxu0 0.0
    %404 = vmatpush1.msra.mxu0 0.0
    %405 = vmatprep.subr.mxu0 0.0
    %406 = vmatpush1.msra.mxu0 0.0
    %407 = vmatprep.subr.mxu0 0.0
    %408 = vmatpush1.msra.mxu0 0.0
    %409 = vmatprep.subr.mxu0 0.0
    %410 = vmatpush1.msra.mxu0 0.0
    %411 = vmatprep.subr.mxu0 0.0
    %412 = vmatpush1.msra.mxu0 0.0
    %413 = vmatprep.subr.mxu0 0.0
    %414 = vmatpush1.msra.mxu0 0.0
    %415 = vmatprep.mubr.f32.mxu0 0.0
    %416 = vmatmul.mubr.f32.gmra.mrb[0].mxu0 %v349
    %v417 = vpop.f32.mrb[0].mxu0
    %v418 = vadd.f32 0.0, %v417
    %v419 = vpop.f32.mrb[0].mxu0
    %420 = vdwg.mxu0
    %v421 = vld [vmem:[%s6] sm:$0xff]
    %v422 = vld [vmem:[%s6 + $0x8] sm:$0xff]
    %v423 = vld [vmem:[%s6 + $0x10] sm:$0xff]
    %v424 = vld [vmem:[%s6 + $0x18] sm:$0xff]
    %vm425 = vcmask 261120
    %v427 = vsel %vm425, %v418, 0
    %429 = vmatprep.subr.mxu0 0.0
    %430 = vmatpush1.msra.mxu0 %v421
    %431 = vmatprep.subr.mxu0 0.0
    %432 = vmatpush1.msra.mxu0 %v422
    %433 = vmatprep.subr.mxu0 0.0
    %434 = vmatpush1.msra.mxu0 %v423
    %435 = vmatprep.subr.mxu0 0.0
    %436 = vmatpush1.msra.mxu0 %v424
    %437 = vmatprep.subr.mxu0 0.0
    %438 = vmatpush1.msra.mxu0 0.0
    %439 = vmatprep.subr.mxu0 0.0
    %440 = vmatpush1.msra.mxu0 0.0
    %441 = vmatprep.subr.mxu0 0.0
    %442 = vmatpush1.msra.mxu0 0.0
    %443 = vmatprep.subr.mxu0 0.0
    %444 = vmatpush1.msra.mxu0 0.0
    %445 = vmatprep.subr.mxu0 0.0
    %446 = vmatpush1.msra.mxu0 0.0
    %447 = vmatprep.subr.mxu0 0.0
    %448 = vmatpush1.msra.mxu0 0.0
    %449 = vmatprep.subr.mxu0 0.0
    %450 = vmatpush1.msra.mxu0 0.0
    %451 = vmatprep.subr.mxu0 0.0
    %452 = vmatpush1.msra.mxu0 0.0
    %453 = vmatprep.subr.mxu0 0.0
    %454 = vmatpush1.msra.mxu0 0.0
    %455 = vmatprep.subr.mxu0 0.0
    %456 = vmatpush1.msra.mxu0 0.0
    %457 = vmatprep.subr.mxu0 0.0
    %458 = vmatpush1.msra.mxu0 0.0
    %459 = vmatprep.subr.mxu0 0.0
    %460 = vmatpush1.msra.mxu0 0.0
    %461 = vmatprep.subr.mxu0 0.0
    %462 = vmatpush1.msra.mxu0 0.0
    %463 = vmatprep.subr.mxu0 0.0
    %464 = vmatpush1.msra.mxu0 0.0
    %465 = vmatprep.subr.mxu0 0.0
    %466 = vmatpush1.msra.mxu0 0.0
    %467 = vmatprep.subr.mxu0 0.0
    %468 = vmatpush1.msra.mxu0 0.0
    %469 = vmatprep.subr.mxu0 0.0
    %470 = vmatpush1.msra.mxu0 0.0
    %471 = vmatprep.subr.mxu0 0.0
    %472 = vmatpush1.msra.mxu0 0.0
    %473 = vmatprep.subr.mxu0 0.0
    %474 = vmatpush1.msra.mxu0 0.0
    %475 = vmatprep.subr.mxu0 0.0
    %476 = vmatpush1.msra.mxu0 0.0
    %477 = vmatprep.subr.mxu0 0.0
    %478 = vmatpush1.msra.mxu0 0.0
    %479 = vmatprep.subr.mxu0 0.0
    %480 = vmatpush1.msra.mxu0 0.0
    %481 = vmatprep.subr.mxu0 0.0
    %482 = vmatpush1.msra.mxu0 0.0
    %483 = vmatprep.subr.mxu0 0.0
    %484 = vmatpush1.msra.mxu0 0.0
    %485 = vmatprep.subr.mxu0 0.0
    %486 = vmatpush1.msra.mxu0 0.0
    %487 = vmatprep.subr.mxu0 0.0
    %488 = vmatpush1.msra.mxu0 0.0
    %489 = vmatprep.subr.mxu0 0.0
    %490 = vmatpush1.msra.mxu0 0.0
    %491 = vmatprep.subr.mxu0 0.0
    %492 = vmatpush1.msra.mxu0 0.0
    %493 = vmatprep.mubr.f32.mxu0 0.0
    %494 = vmatmul.mubr.f32.gmra.mrb[0].mxu0 %v427
    %v495 = vpop.f32.mrb[0].mxu0
    %v496 = vadd.f32 0.0, %v495
    %v497 = vpop.f32.mrb[0].mxu0
    %498 = vdwg.mxu0
    %v499 = vld [vmem:[%s5] sm:$0xf]
    %v500 = vld [vmem:[%s7] sm:$0xff]
    %v501 = vld [vmem:[%s7 + $0x8] sm:$0xff]
    %v502 = vld [vmem:[%s7 + $0x10] sm:$0xff]
    %v503 = vld [vmem:[%s7 + $0x18] sm:$0xff]
    %v504 = vsub.f32 %v500, %v421
    %v505 = vsub.f32 %v501, %v422
    %v506 = vsub.f32 %v502, %v423
    %v507 = vsub.f32 %v503, %v424
    %v509 = vsel %vm425, %v499, 0
    %511 = vmatprep.subr.mxu0 0.0
    %512 = vmatpush1.msra.mxu0 %v504
    %513 = vmatprep.subr.mxu0 0.0
    %514 = vmatpush1.msra.mxu0 %v505
    %515 = vmatprep.subr.mxu0 0.0
    %516 = vmatpush1.msra.mxu0 %v506
    %517 = vmatprep.subr.mxu0 0.0
    %518 = vmatpush1.msra.mxu0 %v507
    %519 = vmatprep.subr.mxu0 0.0
    %520 = vmatpush1.msra.mxu0 0.0
    %521 = vmatprep.subr.mxu0 0.0
    %522 = vmatpush1.msra.mxu0 0.0
    %523 = vmatprep.subr.mxu0 0.0
    %524 = vmatpush1.msra.mxu0 0.0
    %525 = vmatprep.subr.mxu0 0.0
    %526 = vmatpush1.msra.mxu0 0.0
    %527 = vmatprep.subr.mxu0 0.0
    %528 = vmatpush1.msra.mxu0 0.0
    %529 = vmatprep.subr.mxu0 0.0
    %530 = vmatpush1.msra.mxu0 0.0
    %531 = vmatprep.subr.mxu0 0.0
    %532 = vmatpush1.msra.mxu0 0.0
    %533 = vmatprep.subr.mxu0 0.0
    %534 = vmatpush1.msra.mxu0 0.0
    %535 = vmatprep.subr.mxu0 0.0
    %536 = vmatpush1.msra.mxu0 0.0
    %537 = vmatprep.subr.mxu0 0.0
    %538 = vmatpush1.msra.mxu0 0.0
    %539 = vmatprep.subr.mxu0 0.0
    %540 = vmatpush1.msra.mxu0 0.0
    %541 = vmatprep.subr.mxu0 0.0
    %542 = vmatpush1.msra.mxu0 0.0
    %543 = vmatprep.subr.mxu0 0.0
    %544 = vmatpush1.msra.mxu0 0.0
    %545 = vmatprep.subr.mxu0 0.0
    %546 = vmatpush1.msra.mxu0 0.0
    %547 = vmatprep.subr.mxu0 0.0
    %548 = vmatpush1.msra.mxu0 0.0
    %549 = vmatprep.subr.mxu0 0.0
    %550 = vmatpush1.msra.mxu0 0.0
    %551 = vmatprep.subr.mxu0 0.0
    %552 = vmatpush1.msra.mxu0 0.0
    %553 = vmatprep.subr.mxu0 0.0
    %554 = vmatpush1.msra.mxu0 0.0
    %555 = vmatprep.subr.mxu0 0.0
    %556 = vmatpush1.msra.mxu0 0.0
    %557 = vmatprep.subr.mxu0 0.0
    %558 = vmatpush1.msra.mxu0 0.0
    %559 = vmatprep.subr.mxu0 0.0
    %560 = vmatpush1.msra.mxu0 0.0
    %561 = vmatprep.subr.mxu0 0.0
    %562 = vmatpush1.msra.mxu0 0.0
    %563 = vmatprep.subr.mxu0 0.0
    %564 = vmatpush1.msra.mxu0 0.0
    %565 = vmatprep.subr.mxu0 0.0
    %566 = vmatpush1.msra.mxu0 0.0
    %567 = vmatprep.subr.mxu0 0.0
    %568 = vmatpush1.msra.mxu0 0.0
    %569 = vmatprep.subr.mxu0 0.0
    %570 = vmatpush1.msra.mxu0 0.0
    %571 = vmatprep.subr.mxu0 0.0
    %572 = vmatpush1.msra.mxu0 0.0
    %573 = vmatprep.subr.mxu0 0.0
    %574 = vmatpush1.msra.mxu0 0.0
    %575 = vmatprep.mubr.f32.mxu0 0.0
    %576 = vmatmul.mubr.f32.gmra.mrb[0].mxu0 %v509
    %v577 = vpop.f32.mrb[0].mxu0
    %v578 = vadd.f32 0.0, %v577
    %v579 = vpop.f32.mrb[0].mxu0
    %580 = vdwg.mxu0
    %v583 = vunpack.c.l.s4 1966171168
    %v584 = vunpack.c.0.s8 %v583
    %v585 = vlaneseq
    %v586 = vshrl.u32 %v585, 7
    %v587 = vsub.s32 %v584, %v586
    %v588 = vrot.slane %v578, %v587
    %v589 = vcombine.high %v588, %v588
    %v591 = vunpack.c.l.s4 1966171168
    %v592 = vunpack.c.0.s8 %v591
    %v593 = vlaneseq
    %v594 = vshrl.u32 %v593, 7
    %v595 = vsub.s32 %v592, %v594
    %v596 = vrot.slane %v588, %v595
    %v598 = vunpack.c.l.s4 1966171168
    %v599 = vunpack.c.0.s8 %v598
    %v600 = vlaneseq
    %v601 = vshrl.u32 %v600, 7
    %v602 = vsub.s32 %v599, %v601
    %v603 = vrot.slane %v589, %v602
    %v604 = vcombine.high %v596, %v596
    %v605 = vcombine.high %v603, %v603
    %v606 = vlaneseq
    %v607 = vshrl.u32 %v606, 7
    %v608 = vsub.s32 0, %v607
    %v609 = vrot.slane %v596, %v608
    %v610 = vlaneseq
    %v611 = vshrl.u32 %v610, 7
    %v612 = vsub.s32 0, %v611
    %v613 = vrot.slane %v603, %v612
    %v614 = vlaneseq
    %v615 = vshrl.u32 %v614, 7
    %v616 = vsub.s32 0, %v615
    %v617 = vrot.slane %v604, %v616
    %v618 = vlaneseq
    %v619 = vshrl.u32 %v618, 7
    %v620 = vsub.s32 0, %v619
    %v621 = vrot.slane %v605, %v620
    %v626 = vadd.f32 %v496, %v609
    %v627 = vadd.f32 %v496, %v613
    %v628 = vadd.f32 %v496, %v617
    %v629 = vadd.f32 %v496, %v621
    %v630 = vld [vmem:[%s8] sm:$0x1]
    %v632 = vlaneseq
    %v633 = vshrl.u32 %v632, 7
    %v634 = vsub.s32 0, %v633
    %v635 = vrot.slane %v630, %v634
    %v637 = vadd.f32 %v626, %v635
    %v638 = vadd.f32 %v627, %v635
    %v639 = vadd.f32 %v628, %v635
    %v640 = vadd.f32 %v629, %v635
    %v641 = vmax.f32 %v637, 0.0
    %v642 = vmax.f32 %v638, 0.0
    %v643 = vmax.f32 %v639, 0.0
    %v644 = vmax.f32 %v640, 0.0
    %v645 = vld [vmem:[%s9] sm:$0xff]
    %v646 = vld [vmem:[%s9 + $0x8] sm:$0xff]
    %v647 = vld [vmem:[%s9 + $0x10] sm:$0xff]
    %v648 = vld [vmem:[%s9 + $0x18] sm:$0xff]
    %v649 = vld [vmem:[%s9 + $0x20] sm:$0xff]
    %v650 = vld [vmem:[%s9 + $0x28] sm:$0xff]
    %v651 = vld [vmem:[%s9 + $0x30] sm:$0xff]
    %v652 = vld [vmem:[%s9 + $0x38] sm:$0xff]
    %v653 = vld [vmem:[%s10] sm:$0x1]
    %v655 = vlaneseq
    %v656 = vshrl.u32 %v655, 7
    %v657 = vsub.s32 0, %v656
    %v658 = vrot.slane %v653, %v657
    %v661 = vsel %vm209, %v641, 0
    %v664 = vsel %vm209, %v642, 0
    %v667 = vsel %vm209, %v643, 0
    %v670 = vsel %vm209, %v644, 0
    %672 = vmatprep.subr.mxu0 0.0
    %673 = vmatpush1.msra.mxu0 %v645
    %674 = vmatprep.subr.mxu0 0.0
    %675 = vmatpush1.msra.mxu0 %v646
    %676 = vmatprep.subr.mxu0 0.0
    %677 = vmatpush1.msra.mxu0 %v647
    %678 = vmatprep.subr.mxu0 0.0
    %679 = vmatpush1.msra.mxu0 %v648
    %680 = vmatprep.subr.mxu0 0.0
    %681 = vmatpush1.msra.mxu0 %v649
    %682 = vmatprep.subr.mxu0 0.0
    %683 = vmatpush1.msra.mxu0 %v650
    %684 = vmatprep.subr.mxu0 0.0
    %685 = vmatpush1.msra.mxu0 %v651
    %686 = vmatprep.subr.mxu0 0.0
    %687 = vmatpush1.msra.mxu0 %v652
    %688 = vmatprep.subr.mxu0 0.0
    %689 = vmatpush1.msra.mxu0 0.0
    %690 = vmatprep.subr.mxu0 0.0
    %691 = vmatpush1.msra.mxu0 0.0
    %692 = vmatprep.subr.mxu0 0.0
    %693 = vmatpush1.msra.mxu0 0.0
    %694 = vmatprep.subr.mxu0 0.0
    %695 = vmatpush1.msra.mxu0 0.0
    %696 = vmatprep.subr.mxu0 0.0
    %697 = vmatpush1.msra.mxu0 0.0
    %698 = vmatprep.subr.mxu0 0.0
    %699 = vmatpush1.msra.mxu0 0.0
    %700 = vmatprep.subr.mxu0 0.0
    %701 = vmatpush1.msra.mxu0 0.0
    %702 = vmatprep.subr.mxu0 0.0
    %703 = vmatpush1.msra.mxu0 0.0
    %704 = vmatprep.subr.mxu0 0.0
    %705 = vmatpush1.msra.mxu0 0.0
    %706 = vmatprep.subr.mxu0 0.0
    %707 = vmatpush1.msra.mxu0 0.0
    %708 = vmatprep.subr.mxu0 0.0
    %709 = vmatpush1.msra.mxu0 0.0
    %710 = vmatprep.subr.mxu0 0.0
    %711 = vmatpush1.msra.mxu0 0.0
    %712 = vmatprep.subr.mxu0 0.0
    %713 = vmatpush1.msra.mxu0 0.0
    %714 = vmatprep.subr.mxu0 0.0
    %715 = vmatpush1.msra.mxu0 0.0
    %716 = vmatprep.subr.mxu0 0.0
    %717 = vmatpush1.msra.mxu0 0.0
    %718 = vmatprep.subr.mxu0 0.0
    %719 = vmatpush1.msra.mxu0 0.0
    %720 = vmatprep.subr.mxu0 0.0
    %721 = vmatpush1.msra.mxu0 0.0
    %722 = vmatprep.subr.mxu0 0.0
    %723 = vmatpush1.msra.mxu0 0.0
    %724 = vmatprep.subr.mxu0 0.0
    %725 = vmatpush1.msra.mxu0 0.0
    %726 = vmatprep.subr.mxu0 0.0
    %727 = vmatpush1.msra.mxu0 0.0
    %728 = vmatprep.subr.mxu0 0.0
    %729 = vmatpush1.msra.mxu0 0.0
    %730 = vmatprep.subr.mxu0 0.0
    %731 = vmatpush1.msra.mxu0 0.0
    %732 = vmatprep.subr.mxu0 0.0
    %733 = vmatpush1.msra.mxu0 0.0
    %734 = vmatprep.subr.mxu0 0.0
    %735 = vmatpush1.msra.mxu0 0.0
    %736 = vmatprep.mubr.f32.mxu0 0.0
    %737 = vmatmul.mubr.f32.gmra.mrb[0].mxu0 %v661
    %v738 = vpop.f32.mrb[0].mxu0
    %v739 = vadd.f32 %v658, %v738
    %v740 = vpop.f32.mrb[0].mxu0
    %741 = vmatprep.mubr.f32.mxu0 0.0
    %742 = vmatmul.mubr.f32.gmra.mrb[0].mxu0 %v664
    %v743 = vpop.f32.mrb[0].mxu0
    %v744 = vadd.f32 %v658, %v743
    %v745 = vpop.f32.mrb[0].mxu0
    %746 = vmatprep.mubr.f32.mxu0 0.0
    %747 = vmatmul.mubr.f32.gmra.mrb[0].mxu0 %v667
    %v748 = vpop.f32.mrb[0].mxu0
    %v749 = vadd.f32 %v658, %v748
    %v750 = vpop.f32.mrb[0].mxu0
    %751 = vmatprep.mubr.f32.mxu0 0.0
    %752 = vmatmul.mubr.f32.gmra.mrb[0].mxu0 %v670
    %v753 = vpop.f32.mrb[0].mxu0
    %v754 = vadd.f32 %v658, %v753
    %v755 = vpop.f32.mrb[0].mxu0
    %756 = vdwg.mxu0
    %vm757 = vcmask 80896
    %v758 = vsel %vm757, %v739, 0.0
    %v759 = vsel %vm757, %v744, 0.0
    %v760 = vadd.f32 %v758, %v759
    %v761 = vsel %vm757, %v749, 0.0
    %v762 = vadd.f32 %v760, %v761
    %v763 = vsel %vm757, %v754, 0.0
    %v764 = vadd.f32 %v762, %v763
    %v765 = vrcp.pop 4.0
    %v766 = vmul.f32 %v764, %v765
    %v767 = vxor.u32 %v739, 2147483648
    %v768 = vxor.u32 %v744, 2147483648
    %v769 = vxor.u32 %v749, 2147483648
    %v770 = vxor.u32 %v754, 2147483648
    %v771 = vmul.f32 %v767, 1.442695
    %v772 = vpow.pop %v771
    %v773 = vmul.f32 %v768, 1.442695
    %v774 = vpow.pop %v773
    %v775 = vmul.f32 %v769, 1.442695
    %v776 = vpow.pop %v775
    %v777 = vmul.f32 %v770, 1.442695
    %v778 = vpow.pop %v777
    %v779 = vadd.f32 %v772, 1.0
    %v780 = vadd.f32 %v774, 1.0
    %v781 = vadd.f32 %v776, 1.0
    %v782 = vadd.f32 %v778, 1.0
    %v783 = vrcp.pop %v779
    %v784 = vmul.f32 1.0, %v783
    %v785 = vrcp.pop %v780
    %v786 = vmul.f32 1.0, %v785
    %v787 = vrcp.pop %v781
    %v788 = vmul.f32 1.0, %v787
    %v789 = vrcp.pop %v782
    %v790 = vmul.f32 1.0, %v789
    %v791 = vsel %vm757, %v784, 0.0
    %v792 = vsel %vm757, %v786, 0.0
    %v793 = vadd.f32 %v791, %v792
    %v794 = vsel %vm757, %v788, 0.0
    %v795 = vadd.f32 %v793, %v794
    %v796 = vsel %vm757, %v790, 0.0
    %v797 = vadd.f32 %v795, %v796
    %v798 = vmul.f32 %v797, %v765
    %v799 = vsub.f32 %v784, %v798
    %v800 = vsub.f32 %v786, %v798
    %v801 = vsub.f32 %v788, %v798
    %v802 = vsub.f32 %v790, %v798
    %v803 = vmul.f32 %v799, %v799
    %v804 = vmul.f32 %v800, %v800
    %v805 = vmul.f32 %v801, %v801
    %v806 = vmul.f32 %v802, %v802
    %v807 = vsel %vm757, %v803, 0.0
    %v808 = vsel %vm757, %v804, 0.0
    %v809 = vadd.f32 %v807, %v808
    %v810 = vsel %vm757, %v805, 0.0
    %v811 = vadd.f32 %v809, %v810
    %v812 = vsel %vm757, %v806, 0.0
    %v813 = vadd.f32 %v811, %v812
    %v814 = vrcp.pop 3.0
    %v815 = vmul.f32 %v813, %v814
    %v816 = vrsqrt.pop %v815
    %v817 = vmul.f32 %v815, %v816
    %vm818 = vcmp.eq.f32.partialorder %v815, inf
    %v819 = vsel %vm818, %v815, %v817
    %vm820 = vcmp.eq.f32.partialorder %v815, 0.0
    %v821 = vand.u32 %v815, 2147483648
    %v822 = vsel %vm820, %v821, %v819
    %v823 = vsel %vm757, %v822, 0.0
    %824 = vadd.xlane.f32.xlu0 %v823
    %v825 = vpop.xlane.xlu0 %824
    %v826 = vrcp.pop 10.0
    %v827 = vmul.f32 %v825, %v826
    %v828 = vsub.f32 0.0, %v827
    %v829 = vxor.u32 %v828, 2147483648
    %v830 = vmul.f32 %v829, 1.442695
    %v831 = vpow.pop %v830
    %v832 = vadd.f32 %v831, 1.0
    %v833 = vrcp.pop %v832
    %v834 = vmul.f32 1.0, %v833
    %v835 = vmul.f32 %v766, %v834
    %836 = vst.msk [vmem:[#allocation5] sm:$0xff] %vm757, %v835
    %837 = vst.msk [vmem:[#allocation6] sm:$0xff] %vm757, %v822
    // Predicated region
    $region50: #{tpu_custom_call.1} parent=1 // pred_check
      _
    $region51: #{tpu_custom_call.1} parent=1 // pred_check_branch
      %839 = sbr.rel (0) target = $region53
    $region52: #{tpu_custom_call.1} parent=1 // pred_region
      %s841 = ssub.s32 128, 128
      %842 = vsyncadd [#allocation4], %s841
      %s844 = sshll.u32 [#allocation5], 4
      %s845 = int_to_ptr.vmem [resolvable:$true] %s844
      %847 = dma.vmem_to_hbm [thread:$0]  %s845, 128, %s11, [#allocation4]
    $region53: #{tpu_custom_call.1} parent=1 // pred_fallthru
      _
    // Predicated region
    $region54: #{tpu_custom_call.1} parent=1 // pred_check
      _
    $region55: #{tpu_custom_call.1} parent=1 // pred_check_branch
      %849 = sbr.rel (0) target = $region57
    $region56: #{tpu_custom_call.1} parent=1 // pred_region
      %s851 = ssub.s32 128, 128
      %852 = vsyncadd [#allocation7], %s851
      %s854 = sshll.u32 [#allocation6], 4
      %s855 = int_to_ptr.vmem [resolvable:$true] %s854
      %857 = dma.vmem_to_hbm [thread:$0]  %s855, 128, %s12, [#allocation7]
    $region57: #{tpu_custom_call.1} parent=1 // pred_fallthru
      _
    // Predicated region
    $region58: #{tpu_custom_call.1} parent=1 // pred_check
      _
    $region59: #{tpu_custom_call.1} parent=1 // pred_check_branch
      %859 = sbr.rel (0) target = $region61
    $region60: #{tpu_custom_call.1} parent=1 // pred_region
      %860 = dma.done [#allocation4], 128
    $region61: #{tpu_custom_call.1} parent=1 // pred_fallthru
      _
    // Predicated region
    $region62: #{tpu_custom_call.1} parent=1 // pred_check
      _
    $region63: #{tpu_custom_call.1} parent=1 // pred_check_branch
      %862 = sbr.rel (0) target = $region65
    $region64: #{tpu_custom_call.1} parent=1 // pred_region
      %863 = dma.done [#allocation7], 128
    $region65: #{tpu_custom_call.1} parent=1 // pred_fallthru
      _
    %864 = vsyncpa [#allocation3], 1
    %865 = vsyncpa [#allocation4], 1
    %866 = vsyncpa [#allocation7], 1

</llo_original>
